<compile_context>
chip_gen: v7x
topology: tpu7x:2x2x1
jax: 0.10.0
libtpu: 0.0.40
codegen_flags: <defaults>
</compile_context>

<pallas_src>
import jax
import jax.numpy as jnp
from jax.experimental import pallas as pl
from jax.experimental.pallas import tpu as pltpu

_N_STREAMS = 4
_LANES = 128
_VMEM_STEP_BUDGET = 8 * 1024 * 1024   # true double-buffered bytes per grid step
_MAX_TILE_ROWS = 512                  # rows of 128 lanes; ~85% roofline already
_VMEM_LIMIT_BYTES = 32 * 1024 * 1024  # explicit scoped-VMEM limit (fits v7x)


def _round_up(x, m):
    return ((x + m - 1) // m) * m


def _sublane(dtype):
    # native sublane multiple: 8 for 4-byte, 16 for 2-byte, 32 for 1-byte
    itemsize = jnp.dtype(dtype).itemsize
    return max(8, 32 // max(1, itemsize))


# ---------------- dense 4D kernels: blocks (C, TR, 128) -> (1, TR, 128) -----

def _sum_kernel(scale_ref, x0, x1, x2, x3, o0, o1, o2, o3):
    # scale = exp_ratio / 3 (the ones/3 filter folded into one SMEM scalar).
    s = scale_ref[0]
    for x_ref, o_ref in zip((x0, x1, x2, x3), (o0, o1, o2, o3)):
        c_dim = x_ref.shape[0]
        acc = x_ref[0].astype(jnp.float32)
        for c in range(1, c_dim):           # unrolled VPU adds, no XLU reduce
            acc = acc + x_ref[c].astype(jnp.float32)
        o_ref[...] = (acc * s)[None].astype(o_ref.dtype)


def _filt_sum_kernel(scale_ref, x0, x1, x2, x3, f0, f1, f2, f3,
                     o0, o1, o2, o3):
    # scale = exp_ratio; per-pixel filters supplied explicitly.
    s = scale_ref[0]
    for x_ref, f_ref, o_ref in zip((x0, x1, x2, x3), (f0, f1, f2, f3),
                                   (o0, o1, o2, o3)):
        c_dim = x_ref.shape[0]
        acc = x_ref[0].astype(jnp.float32) * f_ref[0].astype(jnp.float32)
        for c in range(1, c_dim):
            acc = acc + x_ref[c].astype(jnp.float32) * f_ref[c].astype(jnp.float32)
        o_ref[...] = (acc * s)[None].astype(o_ref.dtype)


# ---------------- ragged fallback kernels: blocks (C, THW) -> (1, THW) ------

def _sum_kernel_flat(scale_ref, x0, x1, x2, x3, o0, o1, o2, o3):
    s = scale_ref[0]
    for x_ref, o_ref in zip((x0, x1, x2, x3), (o0, o1, o2, o3)):
        x = x_ref[...].astype(jnp.float32)
        o_ref[...] = (jnp.sum(x, axis=0, keepdims=True) * s).astype(o_ref.dtype)


def _filt_sum_kernel_flat(scale_ref, x0, x1, x2, x3, f0, f1, f2, f3,
                          o0, o1, o2, o3):
    s = scale_ref[0]
    for x_ref, f_ref, o_ref in zip((x0, x1, x2, x3), (f0, f1, f2, f3),
                                   (o0, o1, o2, o3)):
        x = x_ref[...].astype(jnp.float32)
        f = f_ref[...].astype(jnp.float32)
        o_ref[...] = (jnp.sum(x * f, axis=0, keepdims=True) * s).astype(
            o_ref.dtype)


# ---------------- tiling helpers --------------------------------------------

def _choose_tile_rows(n_rows, bytes_per_row_step, sub):
    """Rows of 128 lanes per grid step: multiple of `sub`, or full extent."""
    max_tr = _VMEM_STEP_BUDGET // (2 * bytes_per_row_step)   # 2x: double buffer
    max_tr = max(sub, (max_tr // sub) * sub)
    max_tr = min(max_tr, max(sub, (_MAX_TILE_ROWS // sub) * sub))
    if n_rows <= max_tr:
        return n_rows          # full-extent block is always legal
    return max_tr


# ---------------- forward ----------------------------------------------------

def stn_forward(rgbs, exp_ratio, filt=False, filts=None):
    """Pallas equivalent of STN.forward.

    rgbs: list of 4 arrays, each (N, C, H, W); exp_ratio: scalar.
    Returns a list of 4 arrays, each (N, 1, H, W).
    """
    assert len(rgbs) == _N_STREAMS
    N, C, H, W = rgbs[0].shape
    for r in rgbs:
        assert r.shape == (N, C, H, W)
    dtype = rgbs[0].dtype
    itemsize = jnp.dtype(dtype).itemsize
    sub = _sublane(dtype)
    HW = H * W

    if filt:
        # TODO(synk): EDNet not defined in source; filters supplied externally.
        assert filts is not None and len(filts) == _N_STREAMS
        scale = jnp.asarray(exp_ratio, jnp.float32).reshape(1)
        n_in_per_stream = 2
    else:
        # ones/3 filter folded into the scalar: sum_C(x) * (exp_ratio / 3).
        scale = (jnp.asarray(exp_ratio, jnp.float32) / 3.0).reshape(1)
        n_in_per_stream = 1

    if HW % _LANES == 0:
        # ---- dense 4D layout: (N, C, R, 128), fully (sub,128)-dense blocks --
        R = HW // _LANES
        bytes_per_row = _N_STREAMS * _LANES * itemsize * (
            n_in_per_stream * C + 1)
        tr = _choose_tile_rows(R, bytes_per_row, sub)
        # keep >= 2 grid steps so v7x's second TensorCore is not idle
        if N * pl.cdiv(R, tr) < 2 and R > sub:
            tr = max(sub, _round_up(pl.cdiv(R, 2), sub))
        n_tiles = pl.cdiv(R, tr)

        def prep(a):
            return a.reshape(N, C, R, _LANES)   # contiguous, no copy

        ins = [prep(r) for r in rgbs]
        if filt:
            ins += [prep(f) for f in filts]

        in_spec = pl.BlockSpec((None, C, tr, _LANES),
                               lambda n, t, s: (n, 0, t, 0))
        out_spec = pl.BlockSpec((None, 1, tr, _LANES),
                                lambda n, t, s: (n, 0, t, 0))
        out_shape = [jax.ShapeDtypeStruct((N, 1, R, _LANES), dtype)] * _N_STREAMS
        kernel = _filt_sum_kernel if filt else _sum_kernel
    else:
        # ---- ragged fallback (HW not 128-aligned): flat (N, C, HW) blocks ---
        # No wrapper pad / output slice: Pallas masks the ragged last block;
        # the reduction is strictly per-pixel over C, so padded lanes cannot
        # contaminate valid outputs.
        if HW < _LANES:
            thw = HW
        else:
            # sublane-padded accounting: C -> round_up(C, sub), out 1 -> sub
            bytes_per_128px = _N_STREAMS * _LANES * itemsize * (
                n_in_per_stream * _round_up(C, sub) + sub)
            max_cols = max(1, _VMEM_STEP_BUDGET // (2 * bytes_per_128px))
            max_cols = min(max_cols, _MAX_TILE_ROWS)
            thw = _LANES * min(max_cols, HW // _LANES)
            if N * pl.cdiv(HW, thw) < 2 and HW > _LANES:
                thw = _LANES * pl.cdiv(pl.cdiv(HW, _LANES), 2)
        n_tiles = pl.cdiv(HW, thw)

        def prep(a):
            return a.reshape(N, C, HW)          # contiguous, no copy

        ins = [prep(r) for r in rgbs]
        if filt:
            ins += [prep(f) for f in filts]

        in_spec = pl.BlockSpec((None, C, thw), lambda n, t, s: (n, 0, t))
        out_spec = pl.BlockSpec((None, 1, thw), lambda n, t, s: (n, 0, t))
        out_shape = [jax.ShapeDtypeStruct((N, 1, HW), dtype)] * _N_STREAMS
        kernel = _filt_sum_kernel_flat if filt else _sum_kernel_flat

    grid_spec = pltpu.PrefetchScalarGridSpec(
        num_scalar_prefetch=1,
        grid=(N, n_tiles),
        in_specs=[in_spec] * len(ins),
        out_specs=[out_spec] * _N_STREAMS,
    )

    outs = pl.pallas_call(
        kernel,
        out_shape=out_shape,
        grid_spec=grid_spec,
        compiler_params=pltpu.CompilerParams(
            dimension_semantics=("parallel", "parallel"),
            vmem_limit_bytes=_VMEM_LIMIT_BYTES,
        ),
    )(scale, *ins)

    return [o.reshape(N, 1, H, W) for o in outs]


if __name__ == "__main__":
    key = jax.random.PRNGKey(0)
    N, C, H, W = 2, 4, 16, 16
    keys = jax.random.split(key, 8)
    rgbs = [
        jax.random.normal(keys[i], (N, C, H, W), dtype=jnp.float32)
        for i in range(4)
    ]
    exp_ratio = 2.0

    # --- default path (filt=False): ones/3 filter folded into the scalar ---
    transes = stn_forward(rgbs, exp_ratio, filt=False)
    transes = [jax.block_until_ready(t) for t in transes]
    for i in range(4):
        ref = jnp.sum(rgbs[i] * (jnp.ones_like(rgbs[i]) / 3.0),
                      axis=1, keepdims=True) * exp_ratio
        assert transes[i].shape == (N, 1, H, W)
        assert jnp.allclose(transes[i], ref, atol=1e-5, rtol=1e-5)

    # --- filt=True path with externally supplied filters ---
    filts = [
        jax.random.normal(keys[4 + i], (N, C, H, W), dtype=jnp.float32)
        for i in range(4)
    ]
    transes_f = stn_forward(rgbs, exp_ratio, filt=True, filts=filts)
    transes_f = [jax.block_until_ready(t) for t in transes_f]
    for i in range(4):
        ref = jnp.sum(rgbs[i] * filts[i], axis=1, keepdims=True) * exp_ratio
        assert transes_f[i].shape == (N, 1, H, W)
        assert jnp.allclose(transes_f[i], ref, atol=1e-5, rtol=1e-5)

    print("KERNEL_OK")
</pallas_src>

<mosaic_0001>
module attributes {stable_mosaic.version = 11 : i64} {
  func.func @_sum_kernel(%arg0: i32, %arg1: i32, %arg2: memref<1xf32, #tpu.memory_space<smem>>, %arg3: memref<1x4x2x128xf32, #tpu.memory_space<vmem>>, %arg4: memref<1x4x2x128xf32, #tpu.memory_space<vmem>>, %arg5: memref<1x4x2x128xf32, #tpu.memory_space<vmem>>, %arg6: memref<1x4x2x128xf32, #tpu.memory_space<vmem>>, %arg7: memref<1x1x2x128xf32, #tpu.memory_space<vmem>>, %arg8: memref<1x1x2x128xf32, #tpu.memory_space<vmem>>, %arg9: memref<1x1x2x128xf32, #tpu.memory_space<vmem>>, %arg10: memref<1x1x2x128xf32, #tpu.memory_space<vmem>>) attributes {dimension_semantics = [#tpu.dimension_semantics<parallel>, #tpu.dimension_semantics<parallel>], iteration_bounds = array<i64: 2, 1>, scalar_prefetch = 1 : i64, scratch_operands = 0 : i64, tpu.core_type = #tpu.core_type<tc>, window_params = [{transform_indices = @transform_0, window_bounds = array<i64: 1, 4, 2, 128>}, {transform_indices = @transform_1, window_bounds = array<i64: 1, 4, 2, 128>}, {transform_indices = @transform_2, window_bounds = array<i64: 1, 4, 2, 128>}, {transform_indices = @transform_3, window_bounds = array<i64: 1, 4, 2, 128>}, {transform_indices = @transform_4, window_bounds = array<i64: 1, 1, 2, 128>}, {transform_indices = @transform_5, window_bounds = array<i64: 1, 1, 2, 128>}, {transform_indices = @transform_6, window_bounds = array<i64: 1, 1, 2, 128>}, {transform_indices = @transform_7, window_bounds = array<i64: 1, 1, 2, 128>}]} {
    %c0 = arith.constant 0 : index
    %0 = memref.load %arg2[%c0] : memref<1xf32, #tpu.memory_space<smem>>
    %c0_0 = arith.constant 0 : index
    %c0_1 = arith.constant 0 : index
    %c0_2 = arith.constant 0 : index
    %c0_3 = arith.constant 0 : index
    %1 = vector.load %arg3[%c0_0, %c0_1, %c0_2, %c0_3] : memref<1x4x2x128xf32, #tpu.memory_space<vmem>>, vector<1x1x2x128xf32>
    %2 = vector.shape_cast %1 : vector<1x1x2x128xf32> to vector<2x128xf32>
    %c0_4 = arith.constant 0 : index
    %c1 = arith.constant 1 : index
    %c0_5 = arith.constant 0 : index
    %c0_6 = arith.constant 0 : index
    %3 = vector.load %arg3[%c0_4, %c1, %c0_5, %c0_6] : memref<1x4x2x128xf32, #tpu.memory_space<vmem>>, vector<1x1x2x128xf32>
    %4 = vector.shape_cast %3 : vector<1x1x2x128xf32> to vector<2x128xf32>
    %5 = arith.addf %2, %4 : vector<2x128xf32>
    %c0_7 = arith.constant 0 : index
    %c2 = arith.constant 2 : index
    %c0_8 = arith.constant 0 : index
    %c0_9 = arith.constant 0 : index
    %6 = vector.load %arg3[%c0_7, %c2, %c0_8, %c0_9] : memref<1x4x2x128xf32, #tpu.memory_space<vmem>>, vector<1x1x2x128xf32>
    %7 = vector.shape_cast %6 : vector<1x1x2x128xf32> to vector<2x128xf32>
    %8 = arith.addf %5, %7 : vector<2x128xf32>
    %c0_10 = arith.constant 0 : index
    %c3 = arith.constant 3 : index
    %c0_11 = arith.constant 0 : index
    %c0_12 = arith.constant 0 : index
    %9 = vector.load %arg3[%c0_10, %c3, %c0_11, %c0_12] : memref<1x4x2x128xf32, #tpu.memory_space<vmem>>, vector<1x1x2x128xf32>
    %10 = vector.shape_cast %9 : vector<1x1x2x128xf32> to vector<2x128xf32>
    %11 = arith.addf %8, %10 : vector<2x128xf32>
    %12 = vector.broadcast %0 : f32 to vector<2x128xf32>
    %13 = arith.mulf %11, %12 : vector<2x128xf32>
    %14 = vector.shape_cast %13 : vector<2x128xf32> to vector<1x2x128xf32>
    %c0_13 = arith.constant 0 : index
    %c0_14 = arith.constant 0 : index
    %c0_15 = arith.constant 0 : index
    %c0_16 = arith.constant 0 : index
    %15 = vector.load %arg7[%c0_13, %c0_14, %c0_15, %c0_16] : memref<1x1x2x128xf32, #tpu.memory_space<vmem>>, vector<1x1x2x128xf32>
    %16 = vector.shape_cast %15 : vector<1x1x2x128xf32> to vector<1x2x128xf32>
    %17 = vector.shape_cast %14 : vector<1x2x128xf32> to vector<1x1x2x128xf32>
    tpu.vector_store %arg7[%c0_13, %c0_14, %c0_15, %c0_16], %17 {strides = array<i32>} : memref<1x1x2x128xf32, #tpu.memory_space<vmem>>, vector<1x1x2x128xf32>,
    %c0_17 = arith.constant 0 : index
    %c0_18 = arith.constant 0 : index
    %c0_19 = arith.constant 0 : index
    %c0_20 = arith.constant 0 : index
    %18 = vector.load %arg4[%c0_17, %c0_18, %c0_19, %c0_20] : memref<1x4x2x128xf32, #tpu.memory_space<vmem>>, vector<1x1x2x128xf32>
    %19 = vector.shape_cast %18 : vector<1x1x2x128xf32> to vector<2x128xf32>
    %c0_21 = arith.constant 0 : index
    %c1_22 = arith.constant 1 : index
    %c0_23 = arith.constant 0 : index
    %c0_24 = arith.constant 0 : index
    %20 = vector.load %arg4[%c0_21, %c1_22, %c0_23, %c0_24] : memref<1x4x2x128xf32, #tpu.memory_space<vmem>>, vector<1x1x2x128xf32>
    %21 = vector.shape_cast %20 : vector<1x1x2x128xf32> to vector<2x128xf32>
    %22 = arith.addf %19, %21 : vector<2x128xf32>
    %c0_25 = arith.constant 0 : index
    %c2_26 = arith.constant 2 : index
    %c0_27 = arith.constant 0 : index
    %c0_28 = arith.constant 0 : index
    %23 = vector.load %arg4[%c0_25, %c2_26, %c0_27, %c0_28] : memref<1x4x2x128xf32, #tpu.memory_space<vmem>>, vector<1x1x2x128xf32>
    %24 = vector.shape_cast %23 : vector<1x1x2x128xf32> to vector<2x128xf32>
    %25 = arith.addf %22, %24 : vector<2x128xf32>
    %c0_29 = arith.constant 0 : index
    %c3_30 = arith.constant 3 : index
    %c0_31 = arith.constant 0 : index
    %c0_32 = arith.constant 0 : index
    %26 = vector.load %arg4[%c0_29, %c3_30, %c0_31, %c0_32] : memref<1x4x2x128xf32, #tpu.memory_space<vmem>>, vector<1x1x2x128xf32>
    %27 = vector.shape_cast %26 : vector<1x1x2x128xf32> to vector<2x128xf32>
    %28 = arith.addf %25, %27 : vector<2x128xf32>
    %29 = vector.broadcast %0 : f32 to vector<2x128xf32>
    %30 = arith.mulf %28, %29 : vector<2x128xf32>
    %31 = vector.shape_cast %30 : vector<2x128xf32> to vector<1x2x128xf32>
    %c0_33 = arith.constant 0 : index
    %c0_34 = arith.constant 0 : index
    %c0_35 = arith.constant 0 : index
    %c0_36 = arith.constant 0 : index
    %32 = vector.load %arg8[%c0_33, %c0_34, %c0_35, %c0_36] : memref<1x1x2x128xf32, #tpu.memory_space<vmem>>, vector<1x1x2x128xf32>
    %33 = vector.shape_cast %32 : vector<1x1x2x128xf32> to vector<1x2x128xf32>
    %34 = vector.shape_cast %31 : vector<1x2x128xf32> to vector<1x1x2x128xf32>
    tpu.vector_store %arg8[%c0_33, %c0_34, %c0_35, %c0_36], %34 {strides = array<i32>} : memref<1x1x2x128xf32, #tpu.memory_space<vmem>>, vector<1x1x2x128xf32>,
    %c0_37 = arith.constant 0 : index
    %c0_38 = arith.constant 0 : index
    %c0_39 = arith.constant 0 : index
    %c0_40 = arith.constant 0 : index
    %35 = vector.load %arg5[%c0_37, %c0_38, %c0_39, %c0_40] : memref<1x4x2x128xf32, #tpu.memory_space<vmem>>, vector<1x1x2x128xf32>
    %36 = vector.shape_cast %35 : vector<1x1x2x128xf32> to vector<2x128xf32>
    %c0_41 = arith.constant 0 : index
    %c1_42 = arith.constant 1 : index
    %c0_43 = arith.constant 0 : index
    %c0_44 = arith.constant 0 : index
    %37 = vector.load %arg5[%c0_41, %c1_42, %c0_43, %c0_44] : memref<1x4x2x128xf32, #tpu.memory_space<vmem>>, vector<1x1x2x128xf32>
    %38 = vector.shape_cast %37 : vector<1x1x2x128xf32> to vector<2x128xf32>
    %39 = arith.addf %36, %38 : vector<2x128xf32>
    %c0_45 = arith.constant 0 : index
    %c2_46 = arith.constant 2 : index
    %c0_47 = arith.constant 0 : index
    %c0_48 = arith.constant 0 : index
    %40 = vector.load %arg5[%c0_45, %c2_46, %c0_47, %c0_48] : memref<1x4x2x128xf32, #tpu.memory_space<vmem>>, vector<1x1x2x128xf32>
    %41 = vector.shape_cast %40 : vector<1x1x2x128xf32> to vector<2x128xf32>
    %42 = arith.addf %39, %41 : vector<2x128xf32>
    %c0_49 = arith.constant 0 : index
    %c3_50 = arith.constant 3 : index
    %c0_51 = arith.constant 0 : index
    %c0_52 = arith.constant 0 : index
    %43 = vector.load %arg5[%c0_49, %c3_50, %c0_51, %c0_52] : memref<1x4x2x128xf32, #tpu.memory_space<vmem>>, vector<1x1x2x128xf32>
    %44 = vector.shape_cast %43 : vector<1x1x2x128xf32> to vector<2x128xf32>
    %45 = arith.addf %42, %44 : vector<2x128xf32>
    %46 = vector.broadcast %0 : f32 to vector<2x128xf32>
    %47 = arith.mulf %45, %46 : vector<2x128xf32>
    %48 = vector.shape_cast %47 : vector<2x128xf32> to vector<1x2x128xf32>
    %c0_53 = arith.constant 0 : index
    %c0_54 = arith.constant 0 : index
    %c0_55 = arith.constant 0 : index
    %c0_56 = arith.constant 0 : index
    %49 = vector.load %arg9[%c0_53, %c0_54, %c0_55, %c0_56] : memref<1x1x2x128xf32, #tpu.memory_space<vmem>>, vector<1x1x2x128xf32>
    %50 = vector.shape_cast %49 : vector<1x1x2x128xf32> to vector<1x2x128xf32>
    %51 = vector.shape_cast %48 : vector<1x2x128xf32> to vector<1x1x2x128xf32>
    tpu.vector_store %arg9[%c0_53, %c0_54, %c0_55, %c0_56], %51 {strides = array<i32>} : memref<1x1x2x128xf32, #tpu.memory_space<vmem>>, vector<1x1x2x128xf32>,
    %c0_57 = arith.constant 0 : index
    %c0_58 = arith.constant 0 : index
    %c0_59 = arith.constant 0 : index
    %c0_60 = arith.constant 0 : index
    %52 = vector.load %arg6[%c0_57, %c0_58, %c0_59, %c0_60] : memref<1x4x2x128xf32, #tpu.memory_space<vmem>>, vector<1x1x2x128xf32>
    %53 = vector.shape_cast %52 : vector<1x1x2x128xf32> to vector<2x128xf32>
    %c0_61 = arith.constant 0 : index
    %c1_62 = arith.constant 1 : index
    %c0_63 = arith.constant 0 : index
    %c0_64 = arith.constant 0 : index
    %54 = vector.load %arg6[%c0_61, %c1_62, %c0_63, %c0_64] : memref<1x4x2x128xf32, #tpu.memory_space<vmem>>, vector<1x1x2x128xf32>
    %55 = vector.shape_cast %54 : vector<1x1x2x128xf32> to vector<2x128xf32>
    %56 = arith.addf %53, %55 : vector<2x128xf32>
    %c0_65 = arith.constant 0 : index
    %c2_66 = arith.constant 2 : index
    %c0_67 = arith.constant 0 : index
    %c0_68 = arith.constant 0 : index
    %57 = vector.load %arg6[%c0_65, %c2_66, %c0_67, %c0_68] : memref<1x4x2x128xf32, #tpu.memory_space<vmem>>, vector<1x1x2x128xf32>
    %58 = vector.shape_cast %57 : vector<1x1x2x128xf32> to vector<2x128xf32>
    %59 = arith.addf %56, %58 : vector<2x128xf32>
    %c0_69 = arith.constant 0 : index
    %c3_70 = arith.constant 3 : index
    %c0_71 = arith.constant 0 : index
    %c0_72 = arith.constant 0 : index
    %60 = vector.load %arg6[%c0_69, %c3_70, %c0_71, %c0_72] : memref<1x4x2x128xf32, #tpu.memory_space<vmem>>, vector<1x1x2x128xf32>
    %61 = vector.shape_cast %60 : vector<1x1x2x128xf32> to vector<2x128xf32>
    %62 = arith.addf %59, %61 : vector<2x128xf32>
    %63 = vector.broadcast %0 : f32 to vector<2x128xf32>
    %64 = arith.mulf %62, %63 : vector<2x128xf32>
    %65 = vector.shape_cast %64 : vector<2x128xf32> to vector<1x2x128xf32>
    %c0_73 = arith.constant 0 : index
    %c0_74 = arith.constant 0 : index
    %c0_75 = arith.constant 0 : index
    %c0_76 = arith.constant 0 : index
    %66 = vector.load %arg10[%c0_73, %c0_74, %c0_75, %c0_76] : memref<1x1x2x128xf32, #tpu.memory_space<vmem>>, vector<1x1x2x128xf32>
    %67 = vector.shape_cast %66 : vector<1x1x2x128xf32> to vector<1x2x128xf32>
    %68 = vector.shape_cast %65 : vector<1x2x128xf32> to vector<1x1x2x128xf32>
    tpu.vector_store %arg10[%c0_73, %c0_74, %c0_75, %c0_76], %68 {strides = array<i32>} : memref<1x1x2x128xf32, #tpu.memory_space<vmem>>, vector<1x1x2x128xf32>,
    return
  }
  func.func @transform_0(%arg0: i32, %arg1: i32, %arg2: memref<1xf32, #tpu.memory_space<smem>>) -> (i32, i32, i32, i32) {
    %c0_i32 = arith.constant 0 : i32
    %c0_i32_0 = arith.constant 0 : i32
    %c0_i32_1 = arith.constant 0 : i32
    return %arg0, %c0_i32, %arg1, %c0_i32_0 : i32, i32, i32, i32
  }
  func.func @transform_1(%arg0: i32, %arg1: i32, %arg2: memref<1xf32, #tpu.memory_space<smem>>) -> (i32, i32, i32, i32) {
    %c0_i32 = arith.constant 0 : i32
    %c0_i32_0 = arith.constant 0 : i32
    %c0_i32_1 = arith.constant 0 : i32
    return %arg0, %c0_i32, %arg1, %c0_i32_0 : i32, i32, i32, i32
  }
  func.func @transform_2(%arg0: i32, %arg1: i32, %arg2: memref<1xf32, #tpu.memory_space<smem>>) -> (i32, i32, i32, i32) {
    %c0_i32 = arith.constant 0 : i32
    %c0_i32_0 = arith.constant 0 : i32
    %c0_i32_1 = arith.constant 0 : i32
    return %arg0, %c0_i32, %arg1, %c0_i32_0 : i32, i32, i32, i32
  }
  func.func @transform_3(%arg0: i32, %arg1: i32, %arg2: memref<1xf32, #tpu.memory_space<smem>>) -> (i32, i32, i32, i32) {
    %c0_i32 = arith.constant 0 : i32
    %c0_i32_0 = arith.constant 0 : i32
    %c0_i32_1 = arith.constant 0 : i32
    return %arg0, %c0_i32, %arg1, %c0_i32_0 : i32, i32, i32, i32
  }
  func.func @transform_4(%arg0: i32, %arg1: i32, %arg2: memref<1xf32, #tpu.memory_space<smem>>) -> (i32, i32, i32, i32) {
    %c0_i32 = arith.constant 0 : i32
    %c0_i32_0 = arith.constant 0 : i32
    %c0_i32_1 = arith.constant 0 : i32
    return %arg0, %c0_i32, %arg1, %c0_i32_0 : i32, i32, i32, i32
  }
  func.func @transform_5(%arg0: i32, %arg1: i32, %arg2: memref<1xf32, #tpu.memory_space<smem>>) -> (i32, i32, i32, i32) {
    %c0_i32 = arith.constant 0 : i32
    %c0_i32_0 = arith.constant 0 : i32
    %c0_i32_1 = arith.constant 0 : i32
    return %arg0, %c0_i32, %arg1, %c0_i32_0 : i32, i32, i32, i32
  }
  func.func @transform_6(%arg0: i32, %arg1: i32, %arg2: memref<1xf32, #tpu.memory_space<smem>>) -> (i32, i32, i32, i32) {
    %c0_i32 = arith.constant 0 : i32
    %c0_i32_0 = arith.constant 0 : i32
    %c0_i32_1 = arith.constant 0 : i32
    return %arg0, %c0_i32, %arg1, %c0_i32_0 : i32, i32, i32, i32
  }
  func.func @transform_7(%arg0: i32, %arg1: i32, %arg2: memref<1xf32, #tpu.memory_space<smem>>) -> (i32, i32, i32, i32) {
    %c0_i32 = arith.constant 0 : i32
    %c0_i32_0 = arith.constant 0 : i32
    %c0_i32_1 = arith.constant 0 : i32
    return %arg0, %c0_i32, %arg1, %c0_i32_0 : i32, i32, i32, i32
  }
}

</mosaic_0001>

<llo_original>
// kernel: tpu_custom_call.1
$region0: #{tpu_custom_call.1}
  #allocation0 [shape = 'u32[]', space=smem, size = 0x4, offset = 0x4, fixed_abs, tag = 'smem constant byte address 0x4 - core index']
  #allocation1 [shape = 'u32[144,128]{1,0:T(1,128)}', space=vmem, size = 0x12000, scoped, tag = 'internal scratch']
  #allocation2 [shape = 's32[1]{0}', space=sflag, size = 0x4, scoped, tag = 'scoped memory for tpu_custom_call.1']
  #allocation3 [shape = 'f32[1]{0:T(128)S(6)}', space=smem, size = 0x200, scoped, tag = 'prefetched SMEM operand 0']
  %s0 = inlined_call_operand.<no memory space> [shape: f32[1], index: 0, kind: input, shape index: {}]
  %s1 = inlined_call_operand.hbm [shape: f32[2,4,2,128], index: 1, kind: input, shape index: {}]
  %s2 = inlined_call_operand.hbm [shape: f32[2,4,2,128], index: 2, kind: input, shape index: {}]
  %s3 = inlined_call_operand.hbm [shape: f32[2,4,2,128], index: 3, kind: input, shape index: {}]
  %s4 = inlined_call_operand.hbm [shape: f32[2,4,2,128], index: 4, kind: input, shape index: {}]
  %s5 = inlined_call_operand.hbm [shape: f32[2,1,2,128], index: 5, kind: output, shape index: {0}]
  %s6 = inlined_call_operand.hbm [shape: f32[2,1,2,128], index: 6, kind: output, shape index: {1}]
  %s7 = inlined_call_operand.hbm [shape: f32[2,1,2,128], index: 7, kind: output, shape index: {2}]
  %s8 = inlined_call_operand.hbm [shape: f32[2,1,2,128], index: 8, kind: output, shape index: {3}]
  %9 = xla_tuple %s5, %s6, %s7, %s8
  %s10 = sld [smem:[#allocation0]]
  $region89: #{tpu_custom_call.1} parent=0
    _
  %s12 = ssub.s32 1, %s10
  %s13 = scalar_select 0, %s12, %s10
  %14 = sst [smem:[#allocation3]] %s0
  $region1: #{tpu_custom_call.1} parent=0
    #allocation4 [shape = 'u8[8192]{0}', space=vmem, size = 0x2000, scoped, tag = 'input window, operand 1']
    #allocation5 [shape = 's32[2]{0}', space=sflag, size = 0x8, scoped, tag = 'scoped memory for tpu_custom_call.1']
    #allocation6 [shape = 's32[2]{0}', space=sflag, size = 0x8, scoped, tag = 'scoped memory for tpu_custom_call.1']
    #allocation7 [shape = 'u8[8192]{0}', space=vmem, size = 0x2000, scoped, tag = 'input window, operand 2']
    #allocation8 [shape = 's32[2]{0}', space=sflag, size = 0x8, scoped, tag = 'scoped memory for tpu_custom_call.1']
    #allocation9 [shape = 'u8[8192]{0}', space=vmem, size = 0x2000, scoped, tag = 'input window, operand 3']
    #allocation10 [shape = 'u8[8192]{0}', space=vmem, size = 0x2000, scoped, tag = 'input window, operand 4']
    #allocation11 [shape = 's32[2]{0}', space=sflag, size = 0x8, scoped, tag = 'scoped memory for tpu_custom_call.1']
    #allocation12 [shape = 'u8[2048]{0}', space=vmem, size = 0x800, scoped, tag = 'output window, operand 0']
    #allocation13 [shape = 'u8[2048]{0}', space=vmem, size = 0x800, scoped, tag = 'output window, operand 1']
    #allocation14 [shape = 's32[2]{0}', space=sflag, size = 0x8, scoped, tag = 'scoped memory for tpu_custom_call.1']
    #allocation15 [shape = 'u8[2048]{0}', space=vmem, size = 0x800, scoped, tag = 'output window, operand 2']
    #allocation16 [shape = 'u8[2048]{0}', space=vmem, size = 0x800, scoped, tag = 'output window, operand 3']
    #allocation17 [shape = 's32[2]{0}', space=sflag, size = 0x8, scoped, tag = 'scoped memory for tpu_custom_call.1']
    %15 = vsyncpa [#allocation5], 0
    %s16 = scalar_lea.sflag [#allocation5], 1
    %17 = vsyncpa %s16, 0
    %18 = vsyncpa [#allocation8], 0
    %s19 = scalar_lea.sflag [#allocation8], 1
    %20 = vsyncpa %s19, 0
    %21 = vsyncpa [#allocation11], 0
    %s22 = scalar_lea.sflag [#allocation11], 1
    %23 = vsyncpa %s22, 0
    %24 = vsyncpa [#allocation6], 0
    %s25 = scalar_lea.sflag [#allocation6], 1
    %26 = vsyncpa %s25, 0
    %27 = vsyncpa [#allocation14], 0
    %s28 = scalar_lea.sflag [#allocation14], 1
    %29 = vsyncpa %s28, 0
    %30 = vsyncpa [#allocation17], 0
    %s31 = scalar_lea.sflag [#allocation17], 1
    %32 = vsyncpa %s31, 0
    loop: start=0, step=1, limit=4
    $region2: #{tpu_custom_call.1} parent=1 // loop_pre_header
      _
    $region3: #{tpu_custom_call.1} parent=1 // loop_header
      %s34 = sphi 0, %s38
      %p35 = scmp.ge.s32.totalorder %s34, 4
      %s41 = sphi 0, %s53
      %s42 = sphi 0, %s49
      %s43 = sphi 0, %s41
      %s44 = sphi 0, %s42
      %s45 = sphi 0, %s43
      %s46 = sphi 0, %s44
      %s58 = sphi 0, %s60
      %s61 = sphi 0, %s58
      %s62 = sphi 0, %s61
      %s78 = sphi 0, %s62
      %s86 = sphi 0, %s88
      %s89 = sphi 0, %s86
      %s90 = sphi 0, %s89
      %s106 = sphi 0, %s90
      %s114 = sphi 0, %s116
      %s117 = sphi 0, %s114
      %s118 = sphi 0, %s117
      %s134 = sphi 0, %s118
      %s142 = sphi 0, %s144
      %s145 = sphi 0, %s142
      %s146 = sphi 0, %s145
      %s162 = sphi 0, %s146
      %s170 = sphi 0, %s172
      %s173 = sphi 0, %s170
      %s174 = sphi 0, %s173
      %s190 = sphi 0, %s174
      %s198 = sphi 0, %s200
      %s201 = sphi 0, %s198
      %s202 = sphi 0, %s201
      %s218 = sphi 0, %s202
      %s226 = sphi 0, %s228
      %s229 = sphi 0, %s226
      %s230 = sphi 0, %s229
      %s246 = sphi 0, %s230
      %s254 = sphi 0, %s256
      %s257 = sphi 0, %s254
      %s258 = sphi 0, %s257
      %s274 = sphi 0, %s258
    $region4: #{tpu_custom_call.1} parent=1 // loop_header_branch
      %37 = sbr.rel (%p35) target = $region8
    $region5: #{tpu_custom_call.1} parent=1 // loop_body
      %s39 = ssub.s32 %s34, 1
      %s40 = ssub.s32 %s34, 2
      %s47 = sadd.s32 1, %s42
      %p48 = scmp.ge.s32.totalorder %s47, 1
      %s49 = scalar_select %p48, 0, %s47
      %s50 = sadd.s32 1, %s41
      %s51 = scalar_select %p48, %s50, %s41
      %p52 = scmp.ge.s32.totalorder %s51, 2
      %s53 = scalar_select %p52, 0, %s51
      %s54 = ssub.s32 %s41, %s53
      %s55 = ssub.s32 %s42, %s49
      %s56 = sor.u32 %s54, %s55
      %p57 = scmp.eq.s32.totalorder %s56, 0
      %s59 = sadd.s32 %s58, 1
      %s60 = scalar_select %p57, %s58, %s59
      %p63 = pneg %p57
      %p64 = scmp.eq.s32.totalorder %s34, 1
      %p65 = por %p63, %p64
      %p66 = scmp.ne.s32.totalorder %s58, %s61
      %p67 = scmp.eq.s32.totalorder %s34, 0
      %p68 = por %p66, %p67
      %p69 = scmp.ne.s32.totalorder %s58, %s61
      %p70 = scmp.eq.s32.totalorder %s39, 1
      %p71 = por %p69, %p70
      %p72 = scmp.ne.s32.totalorder %s61, %s62
      %p73 = scmp.eq.s32.totalorder %s39, 0
      %p74 = por %p72, %p73
      %p75 = scmp.ne.s32.totalorder %s61, %s62
      %p76 = scmp.eq.s32.totalorder %s40, 1
      %p77 = por %p75, %p76
      %p79 = scmp.ne.s32.totalorder %s62, %s78
      %p80 = scmp.eq.s32.totalorder %s40, 0
      %p81 = por %p79, %p80
      %s82 = ssub.s32 %s41, %s53
      %s83 = ssub.s32 %s42, %s49
      %s84 = sor.u32 %s82, %s83
      %p85 = scmp.eq.s32.totalorder %s84, 0
      %s87 = sadd.s32 %s86, 1
      %s88 = scalar_select %p85, %s86, %s87
      %p91 = pneg %p85
      %p92 = scmp.eq.s32.totalorder %s34, 1
      %p93 = por %p91, %p92
      %p94 = scmp.ne.s32.totalorder %s86, %s89
      %p95 = scmp.eq.s32.totalorder %s34, 0
      %p96 = por %p94, %p95
      %p97 = scmp.ne.s32.totalorder %s86, %s89
      %p98 = scmp.eq.s32.totalorder %s39, 1
      %p99 = por %p97, %p98
      %p100 = scmp.ne.s32.totalorder %s89, %s90
      %p101 = scmp.eq.s32.totalorder %s39, 0
      %p102 = por %p100, %p101
      %p103 = scmp.ne.s32.totalorder %s89, %s90
      %p104 = scmp.eq.s32.totalorder %s40, 1
      %p105 = por %p103, %p104
      %p107 = scmp.ne.s32.totalorder %s90, %s106
      %p108 = scmp.eq.s32.totalorder %s40, 0
      %p109 = por %p107, %p108
      %s110 = ssub.s32 %s41, %s53
      %s111 = ssub.s32 %s42, %s49
      %s112 = sor.u32 %s110, %s111
      %p113 = scmp.eq.s32.totalorder %s112, 0
      %s115 = sadd.s32 %s114, 1
      %s116 = scalar_select %p113, %s114, %s115
      %p119 = pneg %p113
      %p120 = scmp.eq.s32.totalorder %s34, 1
      %p121 = por %p119, %p120
      %p122 = scmp.ne.s32.totalorder %s114, %s117
      %p123 = scmp.eq.s32.totalorder %s34, 0
      %p124 = por %p122, %p123
      %p125 = scmp.ne.s32.totalorder %s114, %s117
      %p126 = scmp.eq.s32.totalorder %s39, 1
      %p127 = por %p125, %p126
      %p128 = scmp.ne.s32.totalorder %s117, %s118
      %p129 = scmp.eq.s32.totalorder %s39, 0
      %p130 = por %p128, %p129
      %p131 = scmp.ne.s32.totalorder %s117, %s118
      %p132 = scmp.eq.s32.totalorder %s40, 1
      %p133 = por %p131, %p132
      %p135 = scmp.ne.s32.totalorder %s118, %s134
      %p136 = scmp.eq.s32.totalorder %s40, 0
      %p137 = por %p135, %p136
      %s138 = ssub.s32 %s41, %s53
      %s139 = ssub.s32 %s42, %s49
      %s140 = sor.u32 %s138, %s139
      %p141 = scmp.eq.s32.totalorder %s140, 0
      %s143 = sadd.s32 %s142, 1
      %s144 = scalar_select %p141, %s142, %s143
      %p147 = pneg %p141
      %p148 = scmp.eq.s32.totalorder %s34, 1
      %p149 = por %p147, %p148
      %p150 = scmp.ne.s32.totalorder %s142, %s145
      %p151 = scmp.eq.s32.totalorder %s34, 0
      %p152 = por %p150, %p151
      %p153 = scmp.ne.s32.totalorder %s142, %s145
      %p154 = scmp.eq.s32.totalorder %s39, 1
      %p155 = por %p153, %p154
      %p156 = scmp.ne.s32.totalorder %s145, %s146
      %p157 = scmp.eq.s32.totalorder %s39, 0
      %p158 = por %p156, %p157
      %p159 = scmp.ne.s32.totalorder %s145, %s146
      %p160 = scmp.eq.s32.totalorder %s40, 1
      %p161 = por %p159, %p160
      %p163 = scmp.ne.s32.totalorder %s146, %s162
      %p164 = scmp.eq.s32.totalorder %s40, 0
      %p165 = por %p163, %p164
      %s166 = ssub.s32 %s41, %s53
      %s167 = ssub.s32 %s42, %s49
      %s168 = sor.u32 %s166, %s167
      %p169 = scmp.eq.s32.totalorder %s168, 0
      %s171 = sadd.s32 %s170, 1
      %s172 = scalar_select %p169, %s170, %s171
      %p175 = pneg %p169
      %p176 = scmp.eq.s32.totalorder %s34, 1
      %p177 = por %p175, %p176
      %p178 = scmp.ne.s32.totalorder %s170, %s173
      %p179 = scmp.eq.s32.totalorder %s34, 0
      %p180 = por %p178, %p179
      %p181 = scmp.ne.s32.totalorder %s170, %s173
      %p182 = scmp.eq.s32.totalorder %s39, 1
      %p183 = por %p181, %p182
      %p184 = scmp.ne.s32.totalorder %s173, %s174
      %p185 = scmp.eq.s32.totalorder %s39, 0
      %p186 = por %p184, %p185
      %p187 = scmp.ne.s32.totalorder %s173, %s174
      %p188 = scmp.eq.s32.totalorder %s40, 1
      %p189 = por %p187, %p188
      %p191 = scmp.ne.s32.totalorder %s174, %s190
      %p192 = scmp.eq.s32.totalorder %s40, 0
      %p193 = por %p191, %p192
      %s194 = ssub.s32 %s41, %s53
      %s195 = ssub.s32 %s42, %s49
      %s196 = sor.u32 %s194, %s195
      %p197 = scmp.eq.s32.totalorder %s196, 0
      %s199 = sadd.s32 %s198, 1
      %s200 = scalar_select %p197, %s198, %s199
      %p203 = pneg %p197
      %p204 = scmp.eq.s32.totalorder %s34, 1
      %p205 = por %p203, %p204
      %p206 = scmp.ne.s32.totalorder %s198, %s201
      %p207 = scmp.eq.s32.totalorder %s34, 0
      %p208 = por %p206, %p207
      %p209 = scmp.ne.s32.totalorder %s198, %s201
      %p210 = scmp.eq.s32.totalorder %s39, 1
      %p211 = por %p209, %p210
      %p212 = scmp.ne.s32.totalorder %s201, %s202
      %p213 = scmp.eq.s32.totalorder %s39, 0
      %p214 = por %p212, %p213
      %p215 = scmp.ne.s32.totalorder %s201, %s202
      %p216 = scmp.eq.s32.totalorder %s40, 1
      %p217 = por %p215, %p216
      %p219 = scmp.ne.s32.totalorder %s202, %s218
      %p220 = scmp.eq.s32.totalorder %s40, 0
      %p221 = por %p219, %p220
      %s222 = ssub.s32 %s41, %s53
      %s223 = ssub.s32 %s42, %s49
      %s224 = sor.u32 %s222, %s223
      %p225 = scmp.eq.s32.totalorder %s224, 0
      %s227 = sadd.s32 %s226, 1
      %s228 = scalar_select %p225, %s226, %s227
      %p231 = pneg %p225
      %p232 = scmp.eq.s32.totalorder %s34, 1
      %p233 = por %p231, %p232
      %p234 = scmp.ne.s32.totalorder %s226, %s229
      %p235 = scmp.eq.s32.totalorder %s34, 0
      %p236 = por %p234, %p235
      %p237 = scmp.ne.s32.totalorder %s226, %s229
      %p238 = scmp.eq.s32.totalorder %s39, 1
      %p239 = por %p237, %p238
      %p240 = scmp.ne.s32.totalorder %s229, %s230
      %p241 = scmp.eq.s32.totalorder %s39, 0
      %p242 = por %p240, %p241
      %p243 = scmp.ne.s32.totalorder %s229, %s230
      %p244 = scmp.eq.s32.totalorder %s40, 1
      %p245 = por %p243, %p244
      %p247 = scmp.ne.s32.totalorder %s230, %s246
      %p248 = scmp.eq.s32.totalorder %s40, 0
      %p249 = por %p247, %p248
      %s250 = ssub.s32 %s41, %s53
      %s251 = ssub.s32 %s42, %s49
      %s252 = sor.u32 %s250, %s251
      %p253 = scmp.eq.s32.totalorder %s252, 0
      %s255 = sadd.s32 %s254, 1
      %s256 = scalar_select %p253, %s254, %s255
      %p259 = pneg %p253
      %p260 = scmp.eq.s32.totalorder %s34, 1
      %p261 = por %p259, %p260
      %p262 = scmp.ne.s32.totalorder %s254, %s257
      %p263 = scmp.eq.s32.totalorder %s34, 0
      %p264 = por %p262, %p263
      %p265 = scmp.ne.s32.totalorder %s254, %s257
      %p266 = scmp.eq.s32.totalorder %s39, 1
      %p267 = por %p265, %p266
      %p268 = scmp.ne.s32.totalorder %s257, %s258
      %p269 = scmp.eq.s32.totalorder %s39, 0
      %p270 = por %p268, %p269
      %p271 = scmp.ne.s32.totalorder %s257, %s258
      %p272 = scmp.eq.s32.totalorder %s40, 1
      %p273 = por %p271, %p272
      %p275 = scmp.ne.s32.totalorder %s258, %s274
      %p276 = scmp.eq.s32.totalorder %s40, 0
      %p277 = por %p275, %p276
      %p278 = scmp.le.s32.totalorder 1, %s34
      %p279 = scmp.lt.s32.totalorder %s34, 3
      %p280 = pnand %p278, %p279
      %p281 = pneg %p280
      // Predicated region
      $region9: #{tpu_custom_call.1} parent=5 // pred_check
        _
      $region10: #{tpu_custom_call.1} parent=5 // pred_check_branch
        %283 = sbr.rel (%p280) target = $region12
      $region11: #{tpu_custom_call.1} parent=5 // pred_region
        %s284 = ssub.s32 %s34, 1
      $region12: #{tpu_custom_call.1} parent=5 // pred_fallthru
        _
      %p285 = scmp.lt.s32.totalorder %s34, 2
      // Predicated region
      $region13: #{tpu_custom_call.1} parent=5 // pred_check
        %p286 = pneg %p285
      $region14: #{tpu_custom_call.1} parent=5 // pred_check_branch
        %288 = sbr.rel (%p286) target = $region16
      $region15: #{tpu_custom_call.1} parent=5 // pred_region
        // Predicated region
        $region17: #{tpu_custom_call.1} parent=15 // pred_check
          %p289 = pneg %p68
        $region18: #{tpu_custom_call.1} parent=15 // pred_check_branch
          %291 = sbr.rel (%p289) target = $region20
        $region19: #{tpu_custom_call.1} parent=15 // pred_region
          %s292 = sand.u32 %s58, 1
          %s293 = scalar_lea.sflag [#allocation5], %s292
          %s294 = sand.u32 %s58, 1
          %s295 = smul.addr %s294, 8
          %s296 = scalar_lea.vmem [#allocation4], %s295
          %s298 = ssub.s32 128, 128
          %299 = vsyncadd %s293, %s298
          %s300 = smul.addr %s41, 4
          %s301 = sadd.s32 %s42, %s300
          %s302 = smul.addr %s301, 32
          %s303 = scalar_lea.hbm %s1, %s302
          %s304 = sshll.u32 %s296, 4
          %s305 = int_to_ptr.vmem [resolvable:$true] %s304
          %310 = dma.hbm_to_vmem [thread:$0]  %s303, 128, %s305, %s293, 32, 32, 2
        $region20: #{tpu_custom_call.1} parent=15 // pred_fallthru
          _
        // Predicated region
        $region21: #{tpu_custom_call.1} parent=15 // pred_check
          %p311 = pneg %p96
        $region22: #{tpu_custom_call.1} parent=15 // pred_check_branch
          %313 = sbr.rel (%p311) target = $region24
        $region23: #{tpu_custom_call.1} parent=15 // pred_region
          %s314 = sand.u32 %s34, 1
          %s315 = scalar_lea.sflag [#allocation8], %s314
          %s316 = sand.u32 %s86, 1
          %s317 = smul.addr %s316, 8
          %s318 = scalar_lea.vmem [#allocation7], %s317
          %s320 = ssub.s32 128, 128
          %321 = vsyncadd %s315, %s320
          %s322 = smul.addr %s41, 4
          %s323 = sadd.s32 %s42, %s322
          %s324 = smul.addr %s323, 32
          %s325 = scalar_lea.hbm %s2, %s324
          %s326 = sshll.u32 %s318, 4
          %s327 = int_to_ptr.vmem [resolvable:$true] %s326
          %332 = dma.hbm_to_vmem [thread:$0]  %s325, 128, %s327, %s315, 32, 32, 2
        $region24: #{tpu_custom_call.1} parent=15 // pred_fallthru
          _
        // Predicated region
        $region25: #{tpu_custom_call.1} parent=15 // pred_check
          %p333 = pneg %p124
        $region26: #{tpu_custom_call.1} parent=15 // pred_check_branch
          %335 = sbr.rel (%p333) target = $region28
        $region27: #{tpu_custom_call.1} parent=15 // pred_region
          %s336 = sand.u32 %s34, 1
          %s337 = scalar_lea.sflag [#allocation8], %s336
          %s338 = sand.u32 %s114, 1
          %s339 = smul.addr %s338, 8
          %s340 = scalar_lea.vmem [#allocation9], %s339
          %s342 = ssub.s32 128, 128
          %343 = vsyncadd %s337, %s342
          %s344 = smul.addr %s41, 4
          %s345 = sadd.s32 %s42, %s344
          %s346 = smul.addr %s345, 32
          %s347 = scalar_lea.hbm %s3, %s346
          %s348 = sshll.u32 %s340, 4
          %s349 = int_to_ptr.vmem [resolvable:$true] %s348
          %354 = dma.hbm_to_vmem [thread:$0]  %s347, 128, %s349, %s337, 32, 32, 2
        $region28: #{tpu_custom_call.1} parent=15 // pred_fallthru
          _
        // Predicated region
        $region29: #{tpu_custom_call.1} parent=15 // pred_check
          %p355 = pneg %p152
        $region30: #{tpu_custom_call.1} parent=15 // pred_check_branch
          %357 = sbr.rel (%p355) target = $region32
        $region31: #{tpu_custom_call.1} parent=15 // pred_region
          %s358 = sand.u32 %s142, 1
          %s359 = scalar_lea.sflag [#allocation11], %s358
          %s360 = sand.u32 %s142, 1
          %s361 = smul.addr %s360, 8
          %s362 = scalar_lea.vmem [#allocation10], %s361
          %s364 = ssub.s32 128, 128
          %365 = vsyncadd %s359, %s364
          %s366 = smul.addr %s41, 4
          %s367 = sadd.s32 %s42, %s366
          %s368 = smul.addr %s367, 32
          %s369 = scalar_lea.hbm %s4, %s368
          %s370 = sshll.u32 %s362, 4
          %s371 = int_to_ptr.vmem [resolvable:$true] %s370
          %376 = dma.hbm_to_vmem [thread:$0]  %s369, 128, %s371, %s359, 32, 32, 2
        $region32: #{tpu_custom_call.1} parent=15 // pred_fallthru
          _
      $region16: #{tpu_custom_call.1} parent=5 // pred_fallthru
        _
      %p377 = scmp.le.s32.totalorder 1, %s34
      %p378 = scmp.lt.s32.totalorder %s34, 3
      %p379 = pnand %p377, %p378
      %p380 = pneg %p379
      // Predicated region
      $region33: #{tpu_custom_call.1} parent=5 // pred_check
        _
      $region34: #{tpu_custom_call.1} parent=5 // pred_check_branch
        %382 = sbr.rel (%p379) target = $region36
      $region35: #{tpu_custom_call.1} parent=5 // pred_region
        %s383 = ssub.s32 %s34, 1
        %s384 = sand.u32 %s61, 1
        %s385 = scalar_lea.sflag [#allocation5], %s384
        %s386 = sand.u32 %s61, 1
        %s387 = smul.addr %s386, 8
        %s388 = scalar_lea.vmem [#allocation4], %s387
        // Predicated region
        $region37: #{tpu_custom_call.1} parent=35 // pred_check
          %p389 = pneg %p74
        $region38: #{tpu_custom_call.1} parent=35 // pred_check_branch
          %391 = sbr.rel (%p389) target = $region40
        $region39: #{tpu_custom_call.1} parent=35 // pred_region
          %392 = dma.done %s385, 128
        $region40: #{tpu_custom_call.1} parent=35 // pred_fallthru
          _
        %s393 = sand.u32 %s39, 1
        %s394 = scalar_lea.sflag [#allocation8], %s393
        %s395 = sand.u32 %s89, 1
        %s396 = smul.addr %s395, 8
        %s397 = scalar_lea.vmem [#allocation7], %s396
        // Predicated region
        $region41: #{tpu_custom_call.1} parent=35 // pred_check
          %p398 = pneg %p102
        $region42: #{tpu_custom_call.1} parent=35 // pred_check_branch
          %400 = sbr.rel (%p398) target = $region44
        $region43: #{tpu_custom_call.1} parent=35 // pred_region
          %401 = dma.done %s394, 128
        $region44: #{tpu_custom_call.1} parent=35 // pred_fallthru
          _
        %s402 = sand.u32 %s39, 1
        %s403 = scalar_lea.sflag [#allocation8], %s402
        %s404 = sand.u32 %s117, 1
        %s405 = smul.addr %s404, 8
        %s406 = scalar_lea.vmem [#allocation9], %s405
        // Predicated region
        $region45: #{tpu_custom_call.1} parent=35 // pred_check
          %p407 = pneg %p130
        $region46: #{tpu_custom_call.1} parent=35 // pred_check_branch
          %409 = sbr.rel (%p407) target = $region48
        $region47: #{tpu_custom_call.1} parent=35 // pred_region
          %410 = dma.done %s403, 128
        $region48: #{tpu_custom_call.1} parent=35 // pred_fallthru
          _
        %s411 = sand.u32 %s145, 1
        %s412 = scalar_lea.sflag [#allocation11], %s411
        %s413 = sand.u32 %s145, 1
        %s414 = smul.addr %s413, 8
        %s415 = scalar_lea.vmem [#allocation10], %s414
        // Predicated region
        $region49: #{tpu_custom_call.1} parent=35 // pred_check
          %p416 = pneg %p158
        $region50: #{tpu_custom_call.1} parent=35 // pred_check_branch
          %418 = sbr.rel (%p416) target = $region52
        $region51: #{tpu_custom_call.1} parent=35 // pred_region
          %419 = dma.done %s412, 128
        $region52: #{tpu_custom_call.1} parent=35 // pred_fallthru
          _
        %s420 = sand.u32 %s61, 1
        %s421 = scalar_lea.sflag [#allocation5], %s420
        %s422 = sand.u32 %s61, 1
        %s423 = smul.addr %s422, 8
        %s424 = scalar_lea.vmem [#allocation4], %s423
        %p425 = pneg %p74
        %p426 = pneg %p71
        %s427 = sand.u32 %s39, 1
        %s428 = scalar_lea.sflag [#allocation8], %s427
        %s429 = sand.u32 %s89, 1
        %s430 = smul.addr %s429, 8
        %s431 = scalar_lea.vmem [#allocation7], %s430
        %p432 = pneg %p102
        %p433 = pneg %p99
        %s434 = sand.u32 %s39, 1
        %s435 = scalar_lea.sflag [#allocation8], %s434
        %s436 = sand.u32 %s117, 1
        %s437 = smul.addr %s436, 8
        %s438 = scalar_lea.vmem [#allocation9], %s437
        %p439 = pneg %p130
        %p440 = pneg %p127
        %s441 = sand.u32 %s145, 1
        %s442 = scalar_lea.sflag [#allocation11], %s441
        %s443 = sand.u32 %s145, 1
        %s444 = smul.addr %s443, 8
        %s445 = scalar_lea.vmem [#allocation10], %s444
        %p446 = pneg %p158
        %p447 = pneg %p155
        %p448 = pneg %p186
        %p449 = pneg %p183
        %s450 = sand.u32 %s173, 1
        %s451 = scalar_lea.sflag [#allocation6], %s450
        %s452 = sand.u32 %s173, 1
        %s453 = smul.addr %s452, 2
        %s454 = scalar_lea.vmem [#allocation12], %s453
        %p455 = pneg %p214
        %p456 = pneg %p211
        %s457 = sand.u32 %s39, 1
        %s458 = scalar_lea.sflag [#allocation14], %s457
        %s459 = sand.u32 %s201, 1
        %s460 = smul.addr %s459, 2
        %s461 = scalar_lea.vmem [#allocation13], %s460
        %p462 = pneg %p242
        %p463 = pneg %p239
        %s464 = sand.u32 %s39, 1
        %s465 = scalar_lea.sflag [#allocation14], %s464
        %s466 = sand.u32 %s229, 1
        %s467 = smul.addr %s466, 2
        %s468 = scalar_lea.vmem [#allocation15], %s467
        %p469 = pneg %p270
        %p470 = pneg %p267
        %s471 = sand.u32 %s257, 1
        %s472 = scalar_lea.sflag [#allocation17], %s471
        %s473 = sand.u32 %s257, 1
        %s474 = smul.addr %s473, 2
        %s475 = scalar_lea.vmem [#allocation16], %s474
        %s476 = sld [smem:[#allocation3]]
        %v477 = vld [vmem:[%s388] sm:$0x3]
        %s478 = scalar_lea.vmem %s388, 2 [#allocation4]
        %v479 = vld [vmem:[%s478] sm:$0x3]
        %v480 = vadd.f32 %v477, %v479
        %s481 = scalar_lea.vmem %s388, 4 [#allocation4]
        %v482 = vld [vmem:[%s481] sm:$0x3]
        %v483 = vadd.f32 %v480, %v482
        %s484 = scalar_lea.vmem %s388, 6 [#allocation4]
        %v485 = vld [vmem:[%s484] sm:$0x3]
        %v486 = vadd.f32 %v483, %v485
        %v487 = vstv %s476
        %v488 = vmul.f32 %v486, %v487
        %489 = vst [vmem:[%s454] sm:$0x3] %v488
        %v490 = vld [vmem:[%s397] sm:$0x3]
        %s491 = scalar_lea.vmem %s397, 2 [#allocation7]
        %v492 = vld [vmem:[%s491] sm:$0x3]
        %v493 = vadd.f32 %v490, %v492
        %s494 = scalar_lea.vmem %s397, 4 [#allocation7]
        %v495 = vld [vmem:[%s494] sm:$0x3]
        %v496 = vadd.f32 %v493, %v495
        %s497 = scalar_lea.vmem %s397, 6 [#allocation7]
        %v498 = vld [vmem:[%s497] sm:$0x3]
        %v499 = vadd.f32 %v496, %v498
        %v500 = vmul.f32 %v499, %v487
        %501 = vst [vmem:[%s461] sm:$0x3] %v500
        %v502 = vld [vmem:[%s406] sm:$0x3]
        %s503 = scalar_lea.vmem %s406, 2 [#allocation9]
        %v504 = vld [vmem:[%s503] sm:$0x3]
        %v505 = vadd.f32 %v502, %v504
        %s506 = scalar_lea.vmem %s406, 4 [#allocation9]
        %v507 = vld [vmem:[%s506] sm:$0x3]
        %v508 = vadd.f32 %v505, %v507
        %s509 = scalar_lea.vmem %s406, 6 [#allocation9]
        %v510 = vld [vmem:[%s509] sm:$0x3]
        %v511 = vadd.f32 %v508, %v510
        %v512 = vmul.f32 %v511, %v487
        %513 = vst [vmem:[%s468] sm:$0x3] %v512
        %v514 = vld [vmem:[%s415] sm:$0x3]
        %s515 = scalar_lea.vmem %s415, 2 [#allocation10]
        %v516 = vld [vmem:[%s515] sm:$0x3]
        %v517 = vadd.f32 %v514, %v516
        %s518 = scalar_lea.vmem %s415, 4 [#allocation10]
        %v519 = vld [vmem:[%s518] sm:$0x3]
        %v520 = vadd.f32 %v517, %v519
        %s521 = scalar_lea.vmem %s415, 6 [#allocation10]
        %v522 = vld [vmem:[%s521] sm:$0x3]
        %v523 = vadd.f32 %v520, %v522
        %v524 = vmul.f32 %v523, %v487
        %525 = vst [vmem:[%s475] sm:$0x3] %v524
        %s526 = sand.u32 %s173, 1
        %s527 = scalar_lea.sflag [#allocation6], %s526
        %s528 = sand.u32 %s173, 1
        %s529 = smul.addr %s528, 2
        %s530 = scalar_lea.vmem [#allocation12], %s529
        %s531 = sand.u32 %s39, 1
        %s532 = scalar_lea.sflag [#allocation14], %s531
        %s533 = sand.u32 %s201, 1
        %s534 = smul.addr %s533, 2
        %s535 = scalar_lea.vmem [#allocation13], %s534
        %s536 = sand.u32 %s39, 1
        %s537 = scalar_lea.sflag [#allocation14], %s536
        %s538 = sand.u32 %s229, 1
        %s539 = smul.addr %s538, 2
        %s540 = scalar_lea.vmem [#allocation15], %s539
        %s541 = sand.u32 %s257, 1
        %s542 = scalar_lea.sflag [#allocation17], %s541
        %s543 = sand.u32 %s257, 1
        %s544 = smul.addr %s543, 2
        %s545 = scalar_lea.vmem [#allocation16], %s544
        // Predicated region
        $region53: #{tpu_custom_call.1} parent=35 // pred_check
          %p546 = pneg %p183
        $region54: #{tpu_custom_call.1} parent=35 // pred_check_branch
          %548 = sbr.rel (%p546) target = $region56
        $region55: #{tpu_custom_call.1} parent=35 // pred_region
          %s550 = ssub.s32 32, 32
          %551 = vsyncadd %s527, %s550
          %s552 = sadd.s32 %s44, %s43
          %s553 = smul.addr %s552, 32
          %s554 = scalar_lea.hbm %s5, %s553
          %s556 = sshll.u32 %s530, 4
          %s557 = int_to_ptr.vmem [resolvable:$true] %s556
          %559 = dma.vmem_to_hbm [thread:$0]  %s557, 32, %s554, %s527
        $region56: #{tpu_custom_call.1} parent=35 // pred_fallthru
          _
        // Predicated region
        $region57: #{tpu_custom_call.1} parent=35 // pred_check
          %p560 = pneg %p211
        $region58: #{tpu_custom_call.1} parent=35 // pred_check_branch
          %562 = sbr.rel (%p560) target = $region60
        $region59: #{tpu_custom_call.1} parent=35 // pred_region
          %s564 = ssub.s32 32, 32
          %565 = vsyncadd %s532, %s564
          %s566 = sadd.s32 %s44, %s43
          %s567 = smul.addr %s566, 32
          %s568 = scalar_lea.hbm %s6, %s567
          %s570 = sshll.u32 %s535, 4
          %s571 = int_to_ptr.vmem [resolvable:$true] %s570
          %573 = dma.vmem_to_hbm [thread:$0]  %s571, 32, %s568, %s532
        $region60: #{tpu_custom_call.1} parent=35 // pred_fallthru
          _
        // Predicated region
        $region61: #{tpu_custom_call.1} parent=35 // pred_check
          %p574 = pneg %p239
        $region62: #{tpu_custom_call.1} parent=35 // pred_check_branch
          %576 = sbr.rel (%p574) target = $region64
        $region63: #{tpu_custom_call.1} parent=35 // pred_region
          %s578 = ssub.s32 32, 32
          %579 = vsyncadd %s537, %s578
          %s580 = sadd.s32 %s44, %s43
          %s581 = smul.addr %s580, 32
          %s582 = scalar_lea.hbm %s7, %s581
          %s584 = sshll.u32 %s540, 4
          %s585 = int_to_ptr.vmem [resolvable:$true] %s584
          %587 = dma.vmem_to_hbm [thread:$0]  %s585, 32, %s582, %s537
        $region64: #{tpu_custom_call.1} parent=35 // pred_fallthru
          _
        // Predicated region
        $region65: #{tpu_custom_call.1} parent=35 // pred_check
          %p588 = pneg %p267
        $region66: #{tpu_custom_call.1} parent=35 // pred_check_branch
          %590 = sbr.rel (%p588) target = $region68
        $region67: #{tpu_custom_call.1} parent=35 // pred_region
          %s592 = ssub.s32 32, 32
          %593 = vsyncadd %s542, %s592
          %s594 = sadd.s32 %s44, %s43
          %s595 = smul.addr %s594, 32
          %s596 = scalar_lea.hbm %s8, %s595
          %s598 = sshll.u32 %s545, 4
          %s599 = int_to_ptr.vmem [resolvable:$true] %s598
          %601 = dma.vmem_to_hbm [thread:$0]  %s599, 32, %s596, %s542
        $region68: #{tpu_custom_call.1} parent=35 // pred_fallthru
          _
      $region36: #{tpu_custom_call.1} parent=5 // pred_fallthru
        _
      %p602 = scmp.le.s32.totalorder 2, %s34
      // Predicated region
      $region69: #{tpu_custom_call.1} parent=5 // pred_check
        %p603 = pneg %p602
      $region70: #{tpu_custom_call.1} parent=5 // pred_check_branch
        %605 = sbr.rel (%p603) target = $region72
      $region71: #{tpu_custom_call.1} parent=5 // pred_region
        %s606 = ssub.s32 %s34, 2
        // Predicated region
        $region73: #{tpu_custom_call.1} parent=71 // pred_check
          %p607 = pneg %p189
        $region74: #{tpu_custom_call.1} parent=71 // pred_check_branch
          %609 = sbr.rel (%p607) target = $region76
        $region75: #{tpu_custom_call.1} parent=71 // pred_region
          %s610 = sand.u32 %s174, 1
          %s611 = scalar_lea.sflag [#allocation6], %s610
          %s612 = sand.u32 %s174, 1
          %s613 = smul.addr %s612, 2
          %s614 = scalar_lea.vmem [#allocation12], %s613
          %615 = dma.done %s611, 32
        $region76: #{tpu_custom_call.1} parent=71 // pred_fallthru
          _
        // Predicated region
        $region77: #{tpu_custom_call.1} parent=71 // pred_check
          %p616 = pneg %p217
        $region78: #{tpu_custom_call.1} parent=71 // pred_check_branch
          %618 = sbr.rel (%p616) target = $region80
        $region79: #{tpu_custom_call.1} parent=71 // pred_region
          %s619 = sand.u32 %s40, 1
          %s620 = scalar_lea.sflag [#allocation14], %s619
          %s621 = sand.u32 %s202, 1
          %s622 = smul.addr %s621, 2
          %s623 = scalar_lea.vmem [#allocation13], %s622
          %624 = dma.done %s620, 32
        $region80: #{tpu_custom_call.1} parent=71 // pred_fallthru
          _
        // Predicated region
        $region81: #{tpu_custom_call.1} parent=71 // pred_check
          %p625 = pneg %p245
        $region82: #{tpu_custom_call.1} parent=71 // pred_check_branch
          %627 = sbr.rel (%p625) target = $region84
        $region83: #{tpu_custom_call.1} parent=71 // pred_region
          %s628 = sand.u32 %s40, 1
          %s629 = scalar_lea.sflag [#allocation14], %s628
          %s630 = sand.u32 %s230, 1
          %s631 = smul.addr %s630, 2
          %s632 = scalar_lea.vmem [#allocation15], %s631
          %633 = dma.done %s629, 32
        $region84: #{tpu_custom_call.1} parent=71 // pred_fallthru
          _
        // Predicated region
        $region85: #{tpu_custom_call.1} parent=71 // pred_check
          %p634 = pneg %p273
        $region86: #{tpu_custom_call.1} parent=71 // pred_check_branch
          %636 = sbr.rel (%p634) target = $region88
        $region87: #{tpu_custom_call.1} parent=71 // pred_region
          %s637 = sand.u32 %s258, 1
          %s638 = scalar_lea.sflag [#allocation17], %s637
          %s639 = sand.u32 %s258, 1
          %s640 = smul.addr %s639, 2
          %s641 = scalar_lea.vmem [#allocation16], %s640
          %642 = dma.done %s638, 32
        $region88: #{tpu_custom_call.1} parent=71 // pred_fallthru
          _
      $region72: #{tpu_custom_call.1} parent=5 // pred_fallthru
        _
    $region6: #{tpu_custom_call.1} parent=1 // loop_footer
      %s38 = sadd.s32 1, %s34
    $region7: #{tpu_custom_call.1} parent=1 // loop_footer_branch
      %33 = sbr.rel target = $region3
    $region8: #{tpu_custom_call.1} parent=1 // loop_exit
      _
    %643 = vsyncpa [#allocation5], 1
    %s644 = scalar_lea.sflag [#allocation5], 1
    %645 = vsyncpa %s644, 1
    %646 = vsyncpa [#allocation8], 1
    %s647 = scalar_lea.sflag [#allocation8], 1
    %648 = vsyncpa %s647, 1
    %649 = vsyncpa [#allocation11], 1
    %s650 = scalar_lea.sflag [#allocation11], 1
    %651 = vsyncpa %s650, 1
    %652 = vsyncpa [#allocation6], 1
    %s653 = scalar_lea.sflag [#allocation6], 1
    %654 = vsyncpa %s653, 1
    %655 = vsyncpa [#allocation14], 1
    %s656 = scalar_lea.sflag [#allocation14], 1
    %657 = vsyncpa %s656, 1
    %658 = vsyncpa [#allocation17], 1
    %s659 = scalar_lea.sflag [#allocation17], 1
    %660 = vsyncpa %s659, 1

</llo_original>
